<compile_context>
chip_gen: v6e
topology: v6e:2x2x1
jax: 0.10.0
libtpu: 0.0.40
codegen_flags: <defaults>
</compile_context>

<pallas_src>
import jax
import jax.numpy as jnp
from jax.experimental import pallas as pl
from jax.experimental.pallas import tpu as pltpu

_LANE = 128
_SUBLANE = 8


def _round_up(x: int, m: int) -> int:
    return (x + m - 1) // m * m


def _poisson_noise_kernel(x_ref, noise_ref, o_ref):
    # x_ref/o_ref: (nb, lanes) when C == 1, else (nb, C, lanes).
    # noise_ref:   (nb, lanes) — one value per (batch row, pixel), shared by C.
    x = x_ref[...].astype(jnp.float32)
    noise = noise_ref[...].astype(jnp.float32)
    if x.ndim == 3:
        noise = noise[:, None, :]            # broadcast across the channel dim
    # sqrt(x) is NaN for x < 0, exactly like the PyTorch reference.
    o_ref[...] = (x + jnp.sqrt(x) * noise).astype(o_ref.dtype)


def _choose_lane_tile(hw: int, max_lanes: int) -> int:
    # Full extent when it fits; otherwise a fixed 128-multiple tile.  Ragged
    # edges are handled by the cdiv grid (out-of-range lanes are never stored).
    return hw if hw <= max_lanes else max_lanes


def _choose_batch_tile(n: int, padded_rows_per_batch: int, lanes: int,
                       target_bytes: int) -> int:
    # Batch rows per block, sized against the *padded* VMEM footprint.  The
    # 2-D noise block (nb, lanes) requires nb to be a multiple of 8 or the
    # full batch extent.
    per_batch = padded_rows_per_batch * _round_up(lanes, _LANE) * 4
    nb = max(1, target_bytes // per_batch)
    if nb >= n:
        return n
    if nb >= _SUBLANE:
        return (nb // _SUBLANE) * _SUBLANE
    return n if n <= _SUBLANE else _SUBLANE


def poisson_noise_approx(x: jax.Array, seed: int, *,
                         max_lane_tile: int = 4096,
                         target_block_bytes: int = 4 * 1024 * 1024) -> jax.Array:
    """x: (N, C, H, W) photon counts.  Returns x + sqrt(x) * N(0,1) noise,
    with the noise shared across the channel dimension (torch.randn(N,1,H,W))."""
    N, C, H, W = x.shape
    hw = H * W

    # torch.randn(Nbatch, 1, H, W) equivalent: one draw per (batch, pixel),
    # deterministic in `seed`, shared across channels.
    noise = jax.random.normal(jax.random.PRNGKey(seed), (N, hw), dtype=jnp.float32)

    lanes = _choose_lane_tile(hw, max_lane_tile)
    lanes_pad = _round_up(lanes, _LANE)

    if C == 1:
        # Squeeze the channel dim: no sublane padding at all.
        x2 = x.reshape(N, hw)
        nb = _choose_batch_tile(N, 1, lanes, target_block_bytes)
        x_blk = _round_up(nb, _SUBLANE) * lanes_pad * 4
        noise_blk = x_blk
        x_spec = pl.BlockSpec((nb, lanes), lambda s, b: (b, s))
        noise_spec = pl.BlockSpec((nb, lanes), lambda s, b: (b, s))
        out_spec = pl.BlockSpec((nb, lanes), lambda s, b: (b, s))
        out_shape = jax.ShapeDtypeStruct((N, hw), x.dtype)
    else:
        x2 = x.reshape(N, C, hw)              # contiguous reshape, no transpose
        c_pad = _round_up(C, _SUBLANE)        # account for (8,128) sublane padding
        nb = _choose_batch_tile(N, c_pad, lanes, target_block_bytes)
        x_blk = nb * c_pad * lanes_pad * 4
        noise_blk = _round_up(nb, _SUBLANE) * lanes_pad * 4
        x_spec = pl.BlockSpec((nb, C, lanes), lambda s, b: (b, 0, s))
        noise_spec = pl.BlockSpec((nb, lanes), lambda s, b: (b, s))
        out_spec = pl.BlockSpec((nb, C, lanes), lambda s, b: (b, 0, s))
        out_shape = jax.ShapeDtypeStruct((N, C, hw), x.dtype)

    # Spatial axis first: it usually has the most tiles, so megacore (v7x) can
    # shard it; both axes are fully parallel.
    grid = (pl.cdiv(hw, lanes), pl.cdiv(N, nb))

    # Double-buffered in/out/noise blocks plus headroom for elementwise temps.
    total_vmem = 2 * (2 * x_blk + noise_blk) + 2 * x_blk
    vmem_limit = min(100 * 1024 * 1024,
                     max(32 * 1024 * 1024, int(1.25 * total_vmem)))

    out2 = pl.pallas_call(
        _poisson_noise_kernel,
        out_shape=out_shape,
        grid=grid,
        in_specs=[x_spec, noise_spec],
        out_specs=out_spec,
        compiler_params=pltpu.CompilerParams(
            dimension_semantics=("parallel", "parallel"),
            vmem_limit_bytes=vmem_limit,
        ),
    )(x2, noise)

    return out2.reshape(N, C, H, W)


if __name__ == "__main__":
    # Small shapes consistent with the module: batch=2, channels=4, H=W=16.
    N, C, H, W = 2, 4, 16, 16
    key = jax.random.PRNGKey(0)

    # Photon-count-like strictly positive input (sqrt well conditioned; the
    # PyTorch reference has identical sqrt semantics for negative inputs).
    x = jax.random.uniform(key, (N, C, H, W), dtype=jnp.float32) * 100.0 + 1.0

    out = poisson_noise_approx(x, seed=1234)
    jax.block_until_ready(out)

    assert out.shape == (N, C, H, W)
    assert out.dtype == x.dtype
    assert bool(jnp.all(jnp.isfinite(out)))

    # Exact check against the reference formula with the same noise field.
    noise_ref = jax.random.normal(jax.random.PRNGKey(1234), (N, H * W), jnp.float32)
    expected = x + jnp.sqrt(x) * noise_ref.reshape(N, 1, H, W)
    assert bool(jnp.allclose(out, expected, atol=1e-5, rtol=1e-5))

    # Channel-broadcast semantics: implied noise identical across channels.
    recovered = (out - x) / jnp.sqrt(x)
    assert bool(jnp.allclose(recovered, recovered[:, :1], atol=1e-3, rtol=1e-3))

    # Recovered noise roughly standard normal.
    n0 = recovered[:, 0]
    assert abs(float(jnp.mean(n0))) < 0.5
    assert 0.5 < float(jnp.std(n0)) < 1.5

    # Determinism: same seed -> same output.
    out2 = poisson_noise_approx(x, seed=1234)
    assert bool(jnp.all(out == out2))

    # Exercise the C == 1 fast path too (the common DeepSTORM3D case).
    x1 = x[:, :1]
    out1 = poisson_noise_approx(x1, seed=7)
    jax.block_until_ready(out1)
    noise1 = jax.random.normal(jax.random.PRNGKey(7), (N, H * W), jnp.float32)
    assert bool(jnp.allclose(out1, x1 + jnp.sqrt(x1) * noise1.reshape(N, 1, H, W),
                             atol=1e-5, rtol=1e-5))

    print("KERNEL_OK")
</pallas_src>

<mosaic_0001>
module attributes {stable_mosaic.version = 11 : i64} {
  func.func @_poisson_noise_kernel(%arg0: i32, %arg1: i32, %arg2: memref<2x4x256xf32, #tpu.memory_space<vmem>>, %arg3: memref<2x256xf32, #tpu.memory_space<vmem>>, %arg4: memref<2x4x256xf32, #tpu.memory_space<vmem>>) attributes {dimension_semantics = [#tpu.dimension_semantics<parallel>, #tpu.dimension_semantics<parallel>], iteration_bounds = array<i64: 1, 1>, scalar_prefetch = 0 : i64, scratch_operands = 0 : i64, tpu.core_type = #tpu.core_type<tc>, window_params = [{transform_indices = @transform_0, window_bounds = array<i64: 2, 4, 256>}, {transform_indices = @transform_1, window_bounds = array<i64: 2, 256>}, {transform_indices = @transform_2, window_bounds = array<i64: 2, 4, 256>}]} {
    %c0 = arith.constant 0 : index
    %c0_0 = arith.constant 0 : index
    %c0_1 = arith.constant 0 : index
    %0 = vector.load %arg2[%c0, %c0_0, %c0_1] : memref<2x4x256xf32, #tpu.memory_space<vmem>>, vector<2x4x256xf32>
    %c0_2 = arith.constant 0 : index
    %c0_3 = arith.constant 0 : index
    %1 = vector.load %arg3[%c0_2, %c0_3] : memref<2x256xf32, #tpu.memory_space<vmem>>, vector<2x256xf32>
    %2 = vector.shape_cast %1 : vector<2x256xf32> to vector<2x1x256xf32>
    %3 = math.sqrt %0 : vector<2x4x256xf32>
    %4 = vector.broadcast %2 : vector<2x1x256xf32> to vector<2x4x256xf32>
    %5 = arith.mulf %3, %4 : vector<2x4x256xf32>
    %6 = arith.addf %0, %5 : vector<2x4x256xf32>
    %c0_4 = arith.constant 0 : index
    %c0_5 = arith.constant 0 : index
    %c0_6 = arith.constant 0 : index
    %7 = vector.load %arg4[%c0_4, %c0_5, %c0_6] : memref<2x4x256xf32, #tpu.memory_space<vmem>>, vector<2x4x256xf32>
    tpu.vector_store %arg4[%c0_4, %c0_5, %c0_6], %6 {strides = array<i32>} : memref<2x4x256xf32, #tpu.memory_space<vmem>>, vector<2x4x256xf32>,
    return
  }
  func.func @transform_0(%arg0: i32, %arg1: i32) -> (i32, i32, i32) {
    %c0_i32 = arith.constant 0 : i32
    %c0_i32_0 = arith.constant 0 : i32
    return %arg1, %c0_i32, %arg0 : i32, i32, i32
  }
  func.func @transform_1(%arg0: i32, %arg1: i32) -> (i32, i32) {
    %c0_i32 = arith.constant 0 : i32
    return %arg1, %arg0 : i32, i32
  }
  func.func @transform_2(%arg0: i32, %arg1: i32) -> (i32, i32, i32) {
    %c0_i32 = arith.constant 0 : i32
    %c0_i32_0 = arith.constant 0 : i32
    return %arg1, %c0_i32, %arg0 : i32, i32, i32
  }
}

</mosaic_0001>

<llo_original>
// kernel: tpu_custom_call.1
$region0: #{tpu_custom_call.1}
  #allocation0 [shape = 'u32[]', space=smem, size = 0x4, offset = 0x4, fixed_abs, tag = 'smem constant byte address 0x4 - core index']
  #allocation1 [shape = 'u32[144,128]{1,0:T(1,128)}', space=vmem, size = 0x12000, scoped, tag = 'internal scratch']
  %s0 = inlined_call_operand.hbm [shape: f32[2,4,256], index: 0, kind: input, shape index: {}]
  %s1 = inlined_call_operand.hbm [shape: f32[2,256], index: 1, kind: input, shape index: {}]
  %s2 = inlined_call_operand.hbm [shape: f32[2,4,256], index: 2, kind: output, shape index: {}]
  %s3 = sld [smem:[#allocation0]]
  $region26: #{tpu_custom_call.1} parent=0
    _
  %s5 = ssub.s32 1, %s3
  %s6 = scalar_select 0, %s5, %s3
  $region1: #{tpu_custom_call.1} parent=0
    #allocation2 [shape = 'u8[8192]{0}', space=vmem, size = 0x2000, scoped, tag = 'input window, operand 0, single buffered']
    #allocation3 [shape = 's32[1]{0}', space=sflag, size = 0x4, scoped, tag = 'scoped memory for tpu_custom_call.1']
    #allocation4 [shape = 's32[1]{0}', space=sflag, size = 0x4, scoped, tag = 'scoped memory for tpu_custom_call.1']
    #allocation5 [shape = 'u8[2048]{0}', space=vmem, size = 0x800, scoped, tag = 'input window, operand 1, single buffered']
    #allocation6 [shape = 's32[1]{0}', space=sflag, size = 0x4, scoped, tag = 'scoped memory for tpu_custom_call.1']
    #allocation7 [shape = 'u8[8192]{0}', space=vmem, size = 0x2000, scoped, tag = 'output window, operand 0, single buffered']
    %7 = vsyncpa [#allocation3], 0
    %8 = vsyncpa [#allocation6], 0
    %9 = vsyncpa [#allocation4], 0
    // Predicated region
    $region2: #{tpu_custom_call.1} parent=1 // pred_check
      _
    $region3: #{tpu_custom_call.1} parent=1 // pred_check_branch
      %11 = sbr.rel (0) target = $region5
    $region4: #{tpu_custom_call.1} parent=1 // pred_region
      %s13 = ssub.s32 256, 256
      %14 = vsyncadd [#allocation3], %s13
      %s15 = sshll.u32 [#allocation2], 4
      %s16 = int_to_ptr.vmem [resolvable:$true] %s15
      %21 = dma.hbm_to_vmem [thread:$0]  %s0, 256, %s16, [#allocation3], 128, 128, 8
    $region5: #{tpu_custom_call.1} parent=1 // pred_fallthru
      _
    // Predicated region
    $region6: #{tpu_custom_call.1} parent=1 // pred_check
      _
    $region7: #{tpu_custom_call.1} parent=1 // pred_check_branch
      %23 = sbr.rel (0) target = $region9
    $region8: #{tpu_custom_call.1} parent=1 // pred_region
      %s25 = ssub.s32 64, 64
      %26 = vsyncadd [#allocation6], %s25
      %s28 = sshll.u32 [#allocation5], 4
      %s29 = int_to_ptr.vmem [resolvable:$true] %s28
      %31 = dma.hbm_to_vmem [thread:$0]  %s1, 64, %s29, [#allocation6]
    $region9: #{tpu_custom_call.1} parent=1 // pred_fallthru
      _
    // Predicated region
    $region10: #{tpu_custom_call.1} parent=1 // pred_check
      _
    $region11: #{tpu_custom_call.1} parent=1 // pred_check_branch
      %33 = sbr.rel (0) target = $region13
    $region12: #{tpu_custom_call.1} parent=1 // pred_region
      %34 = dma.done [#allocation3], 256
    $region13: #{tpu_custom_call.1} parent=1 // pred_fallthru
      _
    // Predicated region
    $region14: #{tpu_custom_call.1} parent=1 // pred_check
      _
    $region15: #{tpu_custom_call.1} parent=1 // pred_check_branch
      %36 = sbr.rel (0) target = $region17
    $region16: #{tpu_custom_call.1} parent=1 // pred_region
      %37 = dma.done [#allocation6], 64
    $region17: #{tpu_custom_call.1} parent=1 // pred_fallthru
      _
    %v38 = vld [vmem:[#allocation2] sm:$0xff]
    %v39 = vld [vmem:[#allocation2 + $0x8] sm:$0xff]
    %v40 = vld [vmem:[#allocation5] sm:$0xf]
    %v43 = vunpack.c.l.s4 1966171168
    %v44 = vunpack.c.0.s8 %v43
    %v45 = vlaneseq
    %v46 = vshrl.u32 %v45, 7
    %v47 = vsub.s32 %v44, %v46
    %v48 = vrot.slane %v40, %v47
    %v49 = vcombine.high %v48, %v48
    %v50 = vrsqrt.pop %v38
    %v51 = vmul.f32 %v38, %v50
    %vm52 = vcmp.eq.f32.partialorder %v38, inf
    %v53 = vsel %vm52, %v38, %v51
    %vm54 = vcmp.eq.f32.partialorder %v38, 0.0
    %v55 = vand.u32 %v38, 2147483648
    %v56 = vsel %vm54, %v55, %v53
    %v57 = vrsqrt.pop %v39
    %v58 = vmul.f32 %v39, %v57
    %vm59 = vcmp.eq.f32.partialorder %v39, inf
    %v60 = vsel %vm59, %v39, %v58
    %vm61 = vcmp.eq.f32.partialorder %v39, 0.0
    %v62 = vand.u32 %v39, 2147483648
    %v63 = vsel %vm61, %v62, %v60
    %v64 = vlaneseq
    %v65 = vshrl.u32 %v64, 7
    %v66 = vsub.s32 0, %v65
    %v67 = vrot.slane %v48, %v66
    %v68 = vlaneseq
    %v69 = vshrl.u32 %v68, 7
    %v70 = vsub.s32 1, %v69
    %v71 = vrot.slane %v48, %v70
    %v72 = vlaneseq
    %v73 = vshrl.u32 %v72, 7
    %v74 = vsub.s32 0, %v73
    %v75 = vrot.slane %v49, %v74
    %v76 = vlaneseq
    %v77 = vshrl.u32 %v76, 7
    %v78 = vsub.s32 1, %v77
    %v79 = vrot.slane %v49, %v78
    %v80 = vcombine.low %v67, %v71
    %v81 = vcombine.low %v75, %v79
    %v84 = vmul.f32 %v56, %v80
    %v85 = vmul.f32 %v63, %v81
    %v86 = vadd.f32 %v38, %v84
    %v87 = vadd.f32 %v39, %v85
    %88 = vst [vmem:[#allocation7] sm:$0xff] %v86
    %89 = vst [vmem:[#allocation7 + $0x8] sm:$0xff] %v87
    // Predicated region
    $region18: #{tpu_custom_call.1} parent=1 // pred_check
      _
    $region19: #{tpu_custom_call.1} parent=1 // pred_check_branch
      %91 = sbr.rel (0) target = $region21
    $region20: #{tpu_custom_call.1} parent=1 // pred_region
      %s93 = ssub.s32 256, 256
      %94 = vsyncadd [#allocation4], %s93
      %s95 = sshll.u32 [#allocation7], 4
      %s96 = int_to_ptr.vmem [resolvable:$true] %s95
      %101 = dma.vmem_to_hbm [thread:$0]  %s96, 256, %s2, [#allocation4], 128, 128, 8
    $region21: #{tpu_custom_call.1} parent=1 // pred_fallthru
      _
    // Predicated region
    $region22: #{tpu_custom_call.1} parent=1 // pred_check
      _
    $region23: #{tpu_custom_call.1} parent=1 // pred_check_branch
      %103 = sbr.rel (0) target = $region25
    $region24: #{tpu_custom_call.1} parent=1 // pred_region
      %104 = dma.done [#allocation4], 256
    $region25: #{tpu_custom_call.1} parent=1 // pred_fallthru
      _
    %105 = vsyncpa [#allocation3], 1
    %106 = vsyncpa [#allocation6], 1
    %107 = vsyncpa [#allocation4], 1

</llo_original>
